<compile_context>
chip_gen: v7x
topology: tpu7x:2x2x1
jax: 0.10.0
libtpu: 0.0.40
codegen_flags: <defaults>
</compile_context>

<pallas_src>
import jax
import jax.numpy as jnp
from jax.experimental import pallas as pl
from jax.experimental.pallas import tpu as pltpu

HIDDEN = 128
OUTPUT = 64
FUSED_H = 2 * HIDDEN   # 256: target+predictor hidden units stacked on lanes
FUSED_O = 2 * OUTPUT   # 128: tgt -> lanes [0, 64), pred -> lanes [64, 128)


def _round_up(n, m):
    return ((n + m - 1) // m) * m


def _rnd_fused_kernel(x_ref, w1_ref, b1_ref, w2_ref, b2_ref, out_ref, rew_ref):
    # In-kernel input cast (f32 -> bf16): VPU work hidden under MXU/DMA slack.
    x = x_ref[...].astype(w1_ref.dtype)
    # Fused layer 1: [TILE_B, D] @ [D, 256] -> f32 accumulator (MXU).
    h = jnp.dot(x, w1_ref[...], preferred_element_type=jnp.float32)
    h = jnp.maximum(h + b1_ref[...], 0.0)                 # bias + ReLU in f32
    # Fused block-diagonal layer 2: [TILE_B, 256] @ [256, 128] -> f32.
    out = jnp.dot(h.astype(w2_ref.dtype), w2_ref[...],
                  preferred_element_type=jnp.float32) + b2_ref[...]
    # Lane-dense 128-wide store (tgt in lanes [0,64), pred in lanes [64,128)).
    out_ref[...] = out.astype(out_ref.dtype)
    # Fused intrinsic reward from the f32 accumulator (before any down-cast).
    # XLU roll by 64 lanes aligns pred under tgt; squaring makes the sign moot.
    diff = (out - pltpu.roll(out, shift=OUTPUT, axis=1))[:, :OUTPUT]
    rew_ref[...] = jnp.sum(diff * diff, axis=1, keepdims=True) * (1.0 / OUTPUT)


def init_params(key, input_size):
    """Deterministic PyTorch-style (uniform +/- 1/sqrt(fan_in)) init."""
    ks = jax.random.split(key, 8)

    def lin(kw, kb, fan_in, fan_out):
        bound = 1.0 / jnp.sqrt(jnp.float32(fan_in))
        w = jax.random.uniform(kw, (fan_in, fan_out), jnp.float32, -bound, bound)
        b = jax.random.uniform(kb, (1, fan_out), jnp.float32, -bound, bound)
        return w, b

    w1_t, b1_t = lin(ks[0], ks[1], input_size, HIDDEN)
    w2_t, b2_t = lin(ks[2], ks[3], HIDDEN, OUTPUT)
    w1_p, b1_p = lin(ks[4], ks[5], input_size, HIDDEN)
    w2_p, b2_p = lin(ks[6], ks[7], HIDDEN, OUTPUT)
    return dict(w1_t=w1_t, b1_t=b1_t, w2_t=w2_t, b2_t=b2_t,
                w1_p=w1_p, b1_p=b1_p, w2_p=w2_p, b2_p=b2_p)


def fuse_params(params, compute_dtype=jnp.bfloat16):
    """Build fused (concatenated / block-diagonal) weights once, up front.

    Pass compute_dtype=jnp.float32 to keep the frozen target weights exact if
    the reward normalization is numerically sensitive.
    """
    w1 = jnp.concatenate([params["w1_t"], params["w1_p"]], axis=1)   # [D, 256]
    b1 = jnp.concatenate([params["b1_t"], params["b1_p"]], axis=1)   # [1, 256]
    w2 = jnp.zeros((FUSED_H, FUSED_O), jnp.float32)                  # [256, 128]
    w2 = w2.at[:HIDDEN, :OUTPUT].set(params["w2_t"])                 # top-left
    w2 = w2.at[HIDDEN:, OUTPUT:].set(params["w2_p"])                 # bottom-right
    b2 = jnp.concatenate([params["b2_t"], params["b2_p"]], axis=1)   # [1, 128]
    return dict(w1=w1.astype(compute_dtype), b1=b1.astype(jnp.float32),
                w2=w2.astype(compute_dtype), b2=b2.astype(jnp.float32))


def _choose_tile_b(batch, d, x_itemsize, out_itemsize,
                   budget_bytes=20 * 1024 * 1024):
    """Batch-tile heuristic: VMEM budget, 16-alignment, >=2 blocks, <=12.5% pad."""
    per_row = (2 * d * x_itemsize                   # x tile, double-buffered
               + 2 * (FUSED_O * out_itemsize + 4)   # out + reward, double-buffered
               + (FUSED_H + FUSED_O) * 4)           # f32 intermediates
    weight_bytes = 2 * ((d * FUSED_H + FUSED_H * FUSED_O) * 2
                        + (FUSED_H + FUSED_O) * 4)  # resident, double-buffered
    avail = max(budget_bytes - weight_bytes, 1 << 20)
    cap = max(16, min(2048, (int(avail // per_row) // 16) * 16))
    if batch <= 128:
        return _round_up(batch, 8)                  # single small block
    tile = min(cap, 1024, _round_up(batch, 16))
    # v7x megacore: make sure the "parallel" batch axis has >= 2 grid blocks.
    if _round_up(batch, tile) // tile < 2:
        tile = min(tile, _round_up((batch + 1) // 2, 16))
    # Keep batch-padding waste under ~12.5%.
    while tile > 16 and (_round_up(batch, tile) - batch) * 8 > batch:
        tile -= 16
    return max(tile, 16)


def _rnd_pallas_call(x, fused, *, tile_b=None, out_dtype=jnp.bfloat16):
    """Single fused launch. Returns (packed[b_pad,128], reward[b_pad,1], B)."""
    B, D = x.shape
    if tile_b is None:
        tile_b = _choose_tile_b(B, D, x.dtype.itemsize,
                                jnp.dtype(out_dtype).itemsize)
    tile_b = _round_up(min(tile_b, _round_up(B, 8)), 8)
    b_pad = _round_up(B, tile_b)
    # Pad only when the batch is ragged (typically a no-op); padded rows are
    # garbage and sliced off by the wrappers below.
    xp = x if b_pad == B else jnp.pad(x, ((0, b_pad - B), (0, 0)))
    grid = (b_pad // tile_b,)

    out_bytes = jnp.dtype(out_dtype).itemsize
    flops = 2 * b_pad * (D * FUSED_H + FUSED_H * FUSED_O) + 4 * b_pad * FUSED_O
    bytes_accessed = (xp.size * xp.dtype.itemsize
                      + sum(v.size * v.dtype.itemsize for v in fused.values())
                      + b_pad * FUSED_O * out_bytes + b_pad * 4)

    out, rew = pl.pallas_call(
        _rnd_fused_kernel,
        out_shape=(jax.ShapeDtypeStruct((b_pad, FUSED_O), out_dtype),
                   jax.ShapeDtypeStruct((b_pad, 1), jnp.float32)),
        grid_spec=pltpu.PrefetchScalarGridSpec(
            num_scalar_prefetch=0,
            grid=grid,
            in_specs=[
                pl.BlockSpec((tile_b, D), lambda i: (i, 0)),          # x tile
                pl.BlockSpec((D, FUSED_H), lambda i: (0, 0)),         # w1 (resident)
                pl.BlockSpec((1, FUSED_H), lambda i: (0, 0)),         # b1 (resident)
                pl.BlockSpec((FUSED_H, FUSED_O), lambda i: (0, 0)),   # w2 (resident)
                pl.BlockSpec((1, FUSED_O), lambda i: (0, 0)),         # b2 (resident)
            ],
            out_specs=(pl.BlockSpec((tile_b, FUSED_O), lambda i: (i, 0)),
                       pl.BlockSpec((tile_b, 1), lambda i: (i, 0))),
        ),
        compiler_params=pltpu.CompilerParams(
            dimension_semantics=("parallel",),
            vmem_limit_bytes=32 * 1024 * 1024),
        cost_estimate=pl.CostEstimate(
            flops=flops, transcendentals=0, bytes_accessed=bytes_accessed),
    )(xp, fused["w1"], fused["b1"], fused["w2"], fused["b2"])
    return out, rew, B


def rnd_apply(x, fused, *, tile_b=None, out_dtype=jnp.bfloat16):
    """Returns (target_features[B,64], predicted_features[B,64], reward[B])."""
    packed, rew, B = _rnd_pallas_call(x, fused, tile_b=tile_b, out_dtype=out_dtype)
    # Consumers that can take the packed [B,128] slab should use _rnd_pallas_call
    # directly and skip these lane-split slices.
    return packed[:B, :OUTPUT], packed[:B, OUTPUT:], rew[:B, 0]


def rnd_forward(x, fused, **kw):
    """Matches RNDNetwork.forward: (target_features, predicted_features)."""
    tgt, pred, _ = rnd_apply(x, fused, **kw)
    return tgt, pred


def rnd_intrinsic_reward(x, fused, **kw):
    """Matches RNDNetwork.intrinsic_reward (computed in-kernel, f32)."""
    return rnd_apply(x, fused, **kw)[2]


def rnd_forward_ref(x, p):
    """Plain-JAX f32 reference matching the PyTorch forward."""
    h_t = jnp.maximum(x @ p["w1_t"] + p["b1_t"], 0.0)
    tgt = h_t @ p["w2_t"] + p["b2_t"]
    h_p = jnp.maximum(x @ p["w1_p"] + p["b1_p"], 0.0)
    pred = h_p @ p["w2_p"] + p["b2_p"]
    return tgt, pred


def rnd_forward_fused_ref(x, fused):
    """Plain-JAX reference of the fused bf16 pipeline (same dtype path)."""
    xb = x.astype(fused["w1"].dtype)
    h = jnp.dot(xb, fused["w1"], preferred_element_type=jnp.float32) + fused["b1"]
    h = jnp.maximum(h, 0.0).astype(fused["w2"].dtype)
    out = jnp.dot(h, fused["w2"], preferred_element_type=jnp.float32) + fused["b2"]
    tgt, pred = out[:, :OUTPUT], out[:, OUTPUT:]
    rew = jnp.mean((tgt - pred) ** 2, axis=-1)
    return tgt, pred, rew


if __name__ == "__main__":
    key = jax.random.PRNGKey(0)
    k_param, k_x = jax.random.split(key)

    batch = 8
    input_size = 32

    params = init_params(k_param, input_size)
    fused = fuse_params(params)
    x = jax.random.normal(k_x, (batch, input_size), jnp.float32)

    tgt, pred, reward = rnd_apply(x, fused)
    jax.block_until_ready((tgt, pred, reward))

    assert tgt.shape == (batch, OUTPUT) and pred.shape == (batch, OUTPUT)
    assert reward.shape == (batch,)

    # Tight check against the identical bf16/f32-accum pipeline.
    tgt_bf, pred_bf, rew_bf = rnd_forward_fused_ref(x, fused)
    assert jnp.allclose(tgt.astype(jnp.float32), tgt_bf, atol=1e-2, rtol=1e-2)
    assert jnp.allclose(pred.astype(jnp.float32), pred_bf, atol=1e-2, rtol=1e-2)
    assert jnp.allclose(reward, rew_bf, atol=1e-3, rtol=1e-2)

    # Looser check against the full-f32 PyTorch-semantics reference
    # (difference is only bf16 rounding of inputs/weights/outputs).
    tgt_f32, pred_f32 = rnd_forward_ref(x, params)
    assert jnp.allclose(tgt.astype(jnp.float32), tgt_f32, atol=5e-2, rtol=5e-2)
    assert jnp.allclose(pred.astype(jnp.float32), pred_f32, atol=5e-2, rtol=5e-2)
    rew_f32 = jnp.mean((tgt_f32 - pred_f32) ** 2, axis=-1)
    assert jnp.allclose(reward, rew_f32, atol=2e-2, rtol=5e-2)

    print("KERNEL_OK")
</pallas_src>

<mosaic_0001>
module attributes {stable_mosaic.version = 11 : i64} {
  func.func @_rnd_fused_kernel(%arg0: i32, %arg1: memref<8x32xf32, #tpu.memory_space<vmem>>, %arg2: memref<32x256xbf16, #tpu.memory_space<vmem>>, %arg3: memref<1x256xf32, #tpu.memory_space<vmem>>, %arg4: memref<256x128xbf16, #tpu.memory_space<vmem>>, %arg5: memref<1x128xf32, #tpu.memory_space<vmem>>, %arg6: memref<8x128xbf16, #tpu.memory_space<vmem>>, %arg7: memref<8x1xf32, #tpu.memory_space<vmem>>) attributes {dimension_semantics = [#tpu.dimension_semantics<parallel>], iteration_bounds = array<i64: 1>, scalar_prefetch = 0 : i64, scratch_operands = 0 : i64, tpu.core_type = #tpu.core_type<tc>, window_params = [{transform_indices = @transform_0, window_bounds = array<i64: 8, 32>}, {pipeline_mode = #tpu.pipeline_mode<synchronous>, transform_indices = @transform_1, window_bounds = array<i64: 32, 256>}, {pipeline_mode = #tpu.pipeline_mode<synchronous>, transform_indices = @transform_2, window_bounds = array<i64: 1, 256>}, {pipeline_mode = #tpu.pipeline_mode<synchronous>, transform_indices = @transform_3, window_bounds = array<i64: 256, 128>}, {pipeline_mode = #tpu.pipeline_mode<synchronous>, transform_indices = @transform_4, window_bounds = array<i64: 1, 128>}, {transform_indices = @transform_5, window_bounds = array<i64: 8, 128>}, {transform_indices = @transform_6, window_bounds = array<i64: 8, 1>}]} {
    %c0 = arith.constant 0 : index
    %c0_0 = arith.constant 0 : index
    %0 = vector.load %arg1[%c0, %c0_0] : memref<8x32xf32, #tpu.memory_space<vmem>>, vector<8x32xf32>
    %1 = arith.truncf %0 : vector<8x32xf32> to vector<8x32xbf16>
    %c0_1 = arith.constant 0 : index
    %c0_2 = arith.constant 0 : index
    %2 = vector.load %arg2[%c0_1, %c0_2] : memref<32x256xbf16, #tpu.memory_space<vmem>>, vector<32x256xbf16>
    %cst = arith.constant dense<0.000000e+00> : vector<8x256xf32>
    %3 = tpu.matmul %1, %2, %cst {dimension_numbers = #tpu.dot_dimension_numbers<[1], [0], [0], [1], [0, 0, 1, 1], [], []>} : vector<8x32xbf16>, vector<32x256xbf16>, vector<8x256xf32> -> vector<8x256xf32>
    %c0_3 = arith.constant 0 : index
    %c0_4 = arith.constant 0 : index
    %4 = vector.load %arg3[%c0_3, %c0_4] : memref<1x256xf32, #tpu.memory_space<vmem>>, vector<1x256xf32>
    %5 = vector.broadcast %4 : vector<1x256xf32> to vector<8x256xf32>
    %6 = arith.addf %3, %5 : vector<8x256xf32>
    %cst_5 = arith.constant 0.000000e+00 : f32
    %7 = vector.broadcast %cst_5 : f32 to vector<8x256xf32>
    %8 = arith.maximumf %6, %7 : vector<8x256xf32>
    %9 = arith.truncf %8 : vector<8x256xf32> to vector<8x256xbf16>
    %c0_6 = arith.constant 0 : index
    %c0_7 = arith.constant 0 : index
    %10 = vector.load %arg4[%c0_6, %c0_7] : memref<256x128xbf16, #tpu.memory_space<vmem>>, vector<256x128xbf16>
    %cst_8 = arith.constant dense<0.000000e+00> : vector<8x128xf32>
    %11 = tpu.matmul %9, %10, %cst_8 {dimension_numbers = #tpu.dot_dimension_numbers<[1], [0], [0], [1], [0, 0, 1, 1], [], []>} : vector<8x256xbf16>, vector<256x128xbf16>, vector<8x128xf32> -> vector<8x128xf32>
    %c0_9 = arith.constant 0 : index
    %c0_10 = arith.constant 0 : index
    %12 = vector.load %arg5[%c0_9, %c0_10] : memref<1x128xf32, #tpu.memory_space<vmem>>, vector<1x128xf32>
    %13 = vector.broadcast %12 : vector<1x128xf32> to vector<8x128xf32>
    %14 = arith.addf %11, %13 : vector<8x128xf32>
    %15 = arith.truncf %14 : vector<8x128xf32> to vector<8x128xbf16>
    %c0_11 = arith.constant 0 : index
    %c0_12 = arith.constant 0 : index
    %16 = vector.load %arg6[%c0_11, %c0_12] : memref<8x128xbf16, #tpu.memory_space<vmem>>, vector<8x128xbf16>
    tpu.vector_store %arg6[%c0_11, %c0_12], %15 {strides = array<i32>} : memref<8x128xbf16, #tpu.memory_space<vmem>>, vector<8x128xbf16>,
    %c64_i32 = arith.constant 64 : i32
    %17 = tpu.dynamic_rotate %14 by %c64_i32 dim 1 : vector<8x128xf32>, i32 -> vector<8x128xf32>
    %18 = arith.subf %14, %17 : vector<8x128xf32>
    %19 = vector.extract_strided_slice %18 {offsets = [0, 0], sizes = [8, 64], strides = [1, 1]} : vector<8x128xf32> to vector<8x64xf32>
    %20 = arith.mulf %19, %19 : vector<8x64xf32>
    %cst_13 = arith.constant dense<0.000000e+00> : vector<8xf32>
    %21 = vector.multi_reduction <add>, %20, %cst_13 [1] : vector<8x64xf32> to vector<8xf32>
    %22 = vector.shape_cast %21 : vector<8xf32> to vector<8x1xf32>
    %cst_14 = arith.constant 1.562500e-02 : f32
    %23 = vector.broadcast %cst_14 : f32 to vector<8x1xf32>
    %24 = arith.mulf %22, %23 : vector<8x1xf32>
    %c0_15 = arith.constant 0 : index
    %c0_16 = arith.constant 0 : index
    %25 = vector.load %arg7[%c0_15, %c0_16] : memref<8x1xf32, #tpu.memory_space<vmem>>, vector<8x1xf32>
    tpu.vector_store %arg7[%c0_15, %c0_16], %24 {strides = array<i32>} : memref<8x1xf32, #tpu.memory_space<vmem>>, vector<8x1xf32>,
    return
  }
  func.func @transform_0(%arg0: i32) -> (i32, i32) {
    %c0_i32 = arith.constant 0 : i32
    %c0_i32_0 = arith.constant 0 : i32
    return %arg0, %c0_i32 : i32, i32
  }
  func.func @transform_1(%arg0: i32) -> (i32, i32) {
    %c0_i32 = arith.constant 0 : i32
    %c0_i32_0 = arith.constant 0 : i32
    %c0_i32_1 = arith.constant 0 : i32
    return %c0_i32, %c0_i32_0 : i32, i32
  }
  func.func @transform_2(%arg0: i32) -> (i32, i32) {
    %c0_i32 = arith.constant 0 : i32
    %c0_i32_0 = arith.constant 0 : i32
    %c0_i32_1 = arith.constant 0 : i32
    return %c0_i32, %c0_i32_0 : i32, i32
  }
  func.func @transform_3(%arg0: i32) -> (i32, i32) {
    %c0_i32 = arith.constant 0 : i32
    %c0_i32_0 = arith.constant 0 : i32
    %c0_i32_1 = arith.constant 0 : i32
    return %c0_i32, %c0_i32_0 : i32, i32
  }
  func.func @transform_4(%arg0: i32) -> (i32, i32) {
    %c0_i32 = arith.constant 0 : i32
    %c0_i32_0 = arith.constant 0 : i32
    %c0_i32_1 = arith.constant 0 : i32
    return %c0_i32, %c0_i32_0 : i32, i32
  }
  func.func @transform_5(%arg0: i32) -> (i32, i32) {
    %c0_i32 = arith.constant 0 : i32
    %c0_i32_0 = arith.constant 0 : i32
    return %arg0, %c0_i32 : i32, i32
  }
  func.func @transform_6(%arg0: i32) -> (i32, i32) {
    %c0_i32 = arith.constant 0 : i32
    %c0_i32_0 = arith.constant 0 : i32
    return %arg0, %c0_i32 : i32, i32
  }
}

</mosaic_0001>

<llo_original>
// kernel: tpu_custom_call.1
$region0: #{tpu_custom_call.1}
  #allocation0 [shape = 'u32[]', space=smem, size = 0x4, offset = 0x4, fixed_abs, tag = 'smem constant byte address 0x4 - core index']
  #allocation1 [shape = 'u32[144,128]{1,0:T(1,128)}', space=vmem, size = 0x12000, scoped, tag = 'internal scratch']
  %s0 = inlined_call_operand.hbm [shape: f32[8,32], index: 0, kind: input, shape index: {}]
  %s1 = inlined_call_operand.hbm [shape: bf16[32,256], index: 1, kind: input, shape index: {}]
  %s2 = inlined_call_operand.vmem [shape: f32[1,256], index: 2, kind: input, shape index: {}]
  %s3 = inlined_call_operand.hbm [shape: bf16[256,128], index: 3, kind: input, shape index: {}]
  %s4 = inlined_call_operand.vmem [shape: f32[1,128], index: 4, kind: input, shape index: {}]
  %s5 = inlined_call_operand.hbm [shape: bf16[8,128], index: 5, kind: output, shape index: {0}]
  %s6 = inlined_call_operand.vmem [shape: f32[8,1], index: 6, kind: output, shape index: {1}]
  %7 = xla_tuple %s5, %s6
  %s8 = sld [smem:[#allocation0]]
  $region50: #{tpu_custom_call.1} parent=0
    _
  %s10 = ssub.s32 1, %s8
  %s11 = scalar_select 0, %s10, %s8
  $region1: #{tpu_custom_call.1} parent=0
    #allocation2 [shape = 'u8[4096]{0}', space=vmem, size = 0x1000, scoped, tag = 'input window, operand 0, single buffered']
    #allocation3 [shape = 's32[1]{0}', space=sflag, size = 0x4, scoped, tag = 'scoped memory for tpu_custom_call.1']
    #allocation4 [shape = 's32[1]{0}', space=sflag, size = 0x4, scoped, tag = 'scoped memory for tpu_custom_call.1']
    #allocation5 [shape = 'u8[16384]{0}', space=vmem, size = 0x4000, scoped, tag = 'input window, operand 1, single buffered']
    #allocation6 [shape = 's32[1]{0}', space=sflag, size = 0x4, scoped, tag = 'scoped memory for tpu_custom_call.1']
    #allocation7 [shape = 'u8[65536]{0}', space=vmem, size = 0x10000, scoped, tag = 'input window, operand 3, single buffered']
    #allocation8 [shape = 'u8[2048]{0}', space=vmem, size = 0x800, scoped, tag = 'output window, operand 0, single buffered']
    %12 = vsyncpa [#allocation3], 0
    %13 = vsyncpa [#allocation6], 0
    %14 = vsyncpa [#allocation4], 0
    // Predicated region
    $region2: #{tpu_custom_call.1} parent=1 // pred_check
      _
    $region3: #{tpu_custom_call.1} parent=1 // pred_check_branch
      %16 = sbr.rel (0) target = $region5
    $region4: #{tpu_custom_call.1} parent=1 // pred_region
      %s18 = ssub.s32 128, 128
      %19 = vsyncadd [#allocation3], %s18
      %s21 = sshll.u32 [#allocation2], 4
      %s22 = int_to_ptr.vmem [resolvable:$true] %s21
      %24 = dma.hbm_to_vmem [thread:$0]  %s0, 128, %s22, [#allocation3]
    $region5: #{tpu_custom_call.1} parent=1 // pred_fallthru
      _
    // Predicated region
    $region6: #{tpu_custom_call.1} parent=1 // pred_check
      _
    $region7: #{tpu_custom_call.1} parent=1 // pred_check_branch
      %26 = sbr.rel (0) target = $region9
    $region8: #{tpu_custom_call.1} parent=1 // pred_region
      %s28 = ssub.s32 512, 512
      %29 = vsyncadd [#allocation6], %s28
      %s30 = sshll.u32 [#allocation5], 4
      %s31 = int_to_ptr.vmem [resolvable:$true] %s30
      %36 = dma.hbm_to_vmem [thread:$0]  %s1, 512, %s31, [#allocation6], 128, 128, 8
    $region9: #{tpu_custom_call.1} parent=1 // pred_fallthru
      _
    // Predicated region
    $region10: #{tpu_custom_call.1} parent=1 // pred_check
      _
    $region11: #{tpu_custom_call.1} parent=1 // pred_check_branch
      %38 = sbr.rel (0) target = $region13
    $region12: #{tpu_custom_call.1} parent=1 // pred_region
      _
    $region13: #{tpu_custom_call.1} parent=1 // pred_fallthru
      _
    // Predicated region
    $region14: #{tpu_custom_call.1} parent=1 // pred_check
      _
    $region15: #{tpu_custom_call.1} parent=1 // pred_check_branch
      %40 = sbr.rel (0) target = $region17
    $region16: #{tpu_custom_call.1} parent=1 // pred_region
      %s42 = ssub.s32 2048, 2048
      %43 = vsyncadd [#allocation6], %s42
      %s44 = sshll.u32 [#allocation7], 4
      %s45 = int_to_ptr.vmem [resolvable:$true] %s44
      %50 = dma.hbm_to_vmem [thread:$0]  %s3, 2048, %s45, [#allocation6], 64, 64, 4
    $region17: #{tpu_custom_call.1} parent=1 // pred_fallthru
      _
    // Predicated region
    $region18: #{tpu_custom_call.1} parent=1 // pred_check
      _
    $region19: #{tpu_custom_call.1} parent=1 // pred_check_branch
      %52 = sbr.rel (0) target = $region21
    $region20: #{tpu_custom_call.1} parent=1 // pred_region
      _
    $region21: #{tpu_custom_call.1} parent=1 // pred_fallthru
      _
    // Predicated region
    $region22: #{tpu_custom_call.1} parent=1 // pred_check
      _
    $region23: #{tpu_custom_call.1} parent=1 // pred_check_branch
      %54 = sbr.rel (0) target = $region25
    $region24: #{tpu_custom_call.1} parent=1 // pred_region
      %55 = dma.done [#allocation3], 128
    $region25: #{tpu_custom_call.1} parent=1 // pred_fallthru
      _
    // Predicated region
    $region26: #{tpu_custom_call.1} parent=1 // pred_check
      _
    $region27: #{tpu_custom_call.1} parent=1 // pred_check_branch
      %57 = sbr.rel (0) target = $region29
    $region28: #{tpu_custom_call.1} parent=1 // pred_region
      %58 = dma.done [#allocation6], 512
    $region29: #{tpu_custom_call.1} parent=1 // pred_fallthru
      _
    // Predicated region
    $region30: #{tpu_custom_call.1} parent=1 // pred_check
      _
    $region31: #{tpu_custom_call.1} parent=1 // pred_check_branch
      %60 = sbr.rel (0) target = $region33
    $region32: #{tpu_custom_call.1} parent=1 // pred_region
      %61 = dma.done [#allocation6], 2048
    $region33: #{tpu_custom_call.1} parent=1 // pred_fallthru
      _
    %v63 = vld [vmem:[#allocation2] sm:$0xff]
    %v64 = vpack.c.bf16 %v63, %v63
    %v65 = vld [vmem:[#allocation5] sm:$0xff]
    %v66 = vld [vmem:[#allocation5 + $0x8] sm:$0xff]
    %v67 = vld [vmem:[#allocation5 + $0x10] sm:$0xff]
    %v68 = vld [vmem:[#allocation5 + $0x18] sm:$0xff]
    %v69 = vld [vmem:[%s2] sm:$0x3]
    %v71 = vlaneseq
    %v72 = vshrl.u32 %v71, 7
    %v73 = vsub.s32 0, %v72
    %v74 = vrot.slane %v69, %v73
    %v75 = vlaneseq
    %v76 = vshrl.u32 %v75, 7
    %v77 = vsub.s32 1, %v76
    %v78 = vrot.slane %v69, %v77
    %v85 = vunpack.c.l.b16 %v65
    %v86 = vunpack.c.h.b16 %v65
    %v87 = vunpack.c.l.b16 %v66
    %v88 = vunpack.c.h.b16 %v66
    %v89 = vunpack.c.l.b16 %v67
    %v90 = vunpack.c.h.b16 %v67
    %v91 = vunpack.c.l.b16 %v68
    %v92 = vunpack.c.h.b16 %v68
    %v93 = vpack.c.b16 %v87, %v85
    %v94 = vpack.c.b16 %v88, %v86
    %v95 = vpack.c.b16 %v91, %v89
    %v96 = vpack.c.b16 %v92, %v90
    %vm101 = vcmask 261120
    %v103 = vsel %vm101, %v64, 0
    %105 = vmatprep.subr.bf16.mxu0 %v94
    %106 = vmatpush1.bf16.msra.mxu0 %v93
    %107 = vmatprep.subr.bf16.mxu0 %v96
    %108 = vmatpush1.bf16.msra.mxu0 %v95
    %109 = vmatprep.subr.bf16.mxu0 0
    %110 = vmatpush1.bf16.msra.mxu0 0
    %111 = vmatprep.subr.bf16.mxu0 0
    %112 = vmatpush1.bf16.msra.mxu0 0
    %113 = vmatprep.subr.bf16.mxu0 0
    %114 = vmatpush1.bf16.msra.mxu0 0
    %115 = vmatprep.subr.bf16.mxu0 0
    %116 = vmatpush1.bf16.msra.mxu0 0
    %117 = vmatprep.subr.bf16.mxu0 0
    %118 = vmatpush1.bf16.msra.mxu0 0
    %119 = vmatprep.subr.bf16.mxu0 0
    %120 = vmatpush1.bf16.msra.mxu0 0
    %121 = vmatprep.subr.bf16.mxu0 0
    %122 = vmatpush1.bf16.msra.mxu0 0
    %123 = vmatprep.subr.bf16.mxu0 0
    %124 = vmatpush1.bf16.msra.mxu0 0
    %125 = vmatprep.subr.bf16.mxu0 0
    %126 = vmatpush1.bf16.msra.mxu0 0
    %127 = vmatprep.subr.bf16.mxu0 0
    %128 = vmatpush1.bf16.msra.mxu0 0
    %129 = vmatprep.subr.bf16.mxu0 0
    %130 = vmatpush1.bf16.msra.mxu0 0
    %131 = vmatprep.subr.bf16.mxu0 0
    %132 = vmatpush1.bf16.msra.mxu0 0
    %133 = vmatprep.subr.bf16.mxu0 0
    %134 = vmatpush1.bf16.msra.mxu0 0
    %135 = vmatprep.subr.bf16.mxu0 0
    %136 = vmatpush1.bf16.msra.mxu0 0
    %137 = vmatprep.mubr.bf16.mxu0 0
    %138 = vmatmul.mubr.bf16.gmra.mrb[0].mxu0 %v103
    %v139 = vpop.f32.mrb[0].mxu0
    %v140 = vadd.f32 %v74, %v139
    %v141 = vpop.f32.mrb[0].mxu0
    %v142 = vadd.f32 %v78, %v141
    %v143 = vpop.f32.mrb[0].mxu0
    %v144 = vpop.f32.mrb[0].mxu0
    %145 = vdwg.mxu0
    %v146 = vmax.f32 %v140, 0.0
    %v147 = vmax.f32 %v142, 0.0
    %v148 = vpack.c.bf16 %v146, %v146
    %v149 = vpack.c.bf16 %v147, %v147
    %v150 = vld [vmem:[#allocation7] sm:$0xf]
    %v151 = vld [vmem:[#allocation7 + $0x4] sm:$0xf]
    %v152 = vld [vmem:[#allocation7 + $0x8] sm:$0xf]
    %v153 = vld [vmem:[#allocation7 + $0xc] sm:$0xf]
    %v154 = vld [vmem:[#allocation7 + $0x10] sm:$0xf]
    %v155 = vld [vmem:[#allocation7 + $0x14] sm:$0xf]
    %v156 = vld [vmem:[#allocation7 + $0x18] sm:$0xf]
    %v157 = vld [vmem:[#allocation7 + $0x1c] sm:$0xf]
    %v158 = vld [vmem:[#allocation7 + $0x20] sm:$0xf]
    %v159 = vld [vmem:[#allocation7 + $0x24] sm:$0xf]
    %v160 = vld [vmem:[#allocation7 + $0x28] sm:$0xf]
    %v161 = vld [vmem:[#allocation7 + $0x2c] sm:$0xf]
    %v162 = vld [vmem:[#allocation7 + $0x30] sm:$0xf]
    %v163 = vld [vmem:[#allocation7 + $0x34] sm:$0xf]
    %v164 = vld [vmem:[#allocation7 + $0x38] sm:$0xf]
    %v165 = vld [vmem:[#allocation7 + $0x3c] sm:$0xf]
    %v166 = vld [vmem:[#allocation7 + $0x40] sm:$0xf]
    %v167 = vld [vmem:[#allocation7 + $0x44] sm:$0xf]
    %v168 = vld [vmem:[#allocation7 + $0x48] sm:$0xf]
    %v169 = vld [vmem:[#allocation7 + $0x4c] sm:$0xf]
    %v170 = vld [vmem:[#allocation7 + $0x50] sm:$0xf]
    %v171 = vld [vmem:[#allocation7 + $0x54] sm:$0xf]
    %v172 = vld [vmem:[#allocation7 + $0x58] sm:$0xf]
    %v173 = vld [vmem:[#allocation7 + $0x5c] sm:$0xf]
    %v174 = vld [vmem:[#allocation7 + $0x60] sm:$0xf]
    %v175 = vld [vmem:[#allocation7 + $0x64] sm:$0xf]
    %v176 = vld [vmem:[#allocation7 + $0x68] sm:$0xf]
    %v177 = vld [vmem:[#allocation7 + $0x6c] sm:$0xf]
    %v178 = vld [vmem:[#allocation7 + $0x70] sm:$0xf]
    %v179 = vld [vmem:[#allocation7 + $0x74] sm:$0xf]
    %v180 = vld [vmem:[#allocation7 + $0x78] sm:$0xf]
    %v181 = vld [vmem:[#allocation7 + $0x7c] sm:$0xf]
    %v182 = vld [vmem:[%s4] sm:$0x1]
    %v184 = vlaneseq
    %v185 = vshrl.u32 %v184, 7
    %v186 = vsub.s32 0, %v185
    %v187 = vrot.slane %v182, %v186
    %v221 = vunpack.c.l.b16 %v150
    %v222 = vunpack.c.l.b16 %v151
    %v223 = vunpack.c.l.b16 %v152
    %v224 = vunpack.c.l.b16 %v153
    %v225 = vunpack.c.l.b16 %v154
    %v226 = vunpack.c.l.b16 %v155
    %v227 = vunpack.c.l.b16 %v156
    %v228 = vunpack.c.l.b16 %v157
    %v229 = vunpack.c.l.b16 %v158
    %v230 = vunpack.c.l.b16 %v159
    %v231 = vunpack.c.l.b16 %v160
    %v232 = vunpack.c.l.b16 %v161
    %v233 = vunpack.c.l.b16 %v162
    %v234 = vunpack.c.l.b16 %v163
    %v235 = vunpack.c.l.b16 %v164
    %v236 = vunpack.c.l.b16 %v165
    %v237 = vunpack.c.l.b16 %v166
    %v238 = vunpack.c.l.b16 %v167
    %v239 = vunpack.c.l.b16 %v168
    %v240 = vunpack.c.l.b16 %v169
    %v241 = vunpack.c.l.b16 %v170
    %v242 = vunpack.c.l.b16 %v171
    %v243 = vunpack.c.l.b16 %v172
    %v244 = vunpack.c.l.b16 %v173
    %v245 = vunpack.c.l.b16 %v174
    %v246 = vunpack.c.l.b16 %v175
    %v247 = vunpack.c.l.b16 %v176
    %v248 = vunpack.c.l.b16 %v177
    %v249 = vunpack.c.l.b16 %v178
    %v250 = vunpack.c.l.b16 %v179
    %v251 = vunpack.c.l.b16 %v180
    %v252 = vunpack.c.l.b16 %v181
    %v253 = vpack.c.b16 %v222, %v221
    %v254 = vpack.c.b16 %v224, %v223
    %v255 = vpack.c.b16 %v226, %v225
    %v256 = vpack.c.b16 %v228, %v227
    %v257 = vpack.c.b16 %v230, %v229
    %v258 = vpack.c.b16 %v232, %v231
    %v259 = vpack.c.b16 %v234, %v233
    %v260 = vpack.c.b16 %v236, %v235
    %v261 = vpack.c.b16 %v238, %v237
    %v262 = vpack.c.b16 %v240, %v239
    %v263 = vpack.c.b16 %v242, %v241
    %v264 = vpack.c.b16 %v244, %v243
    %v265 = vpack.c.b16 %v246, %v245
    %v266 = vpack.c.b16 %v248, %v247
    %v267 = vpack.c.b16 %v250, %v249
    %v268 = vpack.c.b16 %v252, %v251
    %285 = vmatprep.subr.bf16.mxu0 0
    %286 = vmatpush1.bf16.msra.mxu0 %v253
    %287 = vmatprep.subr.bf16.mxu0 0
    %288 = vmatpush1.bf16.msra.mxu0 %v254
    %289 = vmatprep.subr.bf16.mxu0 0
    %290 = vmatpush1.bf16.msra.mxu0 %v255
    %291 = vmatprep.subr.bf16.mxu0 0
    %292 = vmatpush1.bf16.msra.mxu0 %v256
    %293 = vmatprep.subr.bf16.mxu0 0
    %294 = vmatpush1.bf16.msra.mxu0 %v257
    %295 = vmatprep.subr.bf16.mxu0 0
    %296 = vmatpush1.bf16.msra.mxu0 %v258
    %297 = vmatprep.subr.bf16.mxu0 0
    %298 = vmatpush1.bf16.msra.mxu0 %v259
    %299 = vmatprep.subr.bf16.mxu0 0
    %300 = vmatpush1.bf16.msra.mxu0 %v260
    %301 = vmatprep.subr.bf16.mxu0 0
    %302 = vmatpush1.bf16.msra.mxu0 %v261
    %303 = vmatprep.subr.bf16.mxu0 0
    %304 = vmatpush1.bf16.msra.mxu0 %v262
    %305 = vmatprep.subr.bf16.mxu0 0
    %306 = vmatpush1.bf16.msra.mxu0 %v263
    %307 = vmatprep.subr.bf16.mxu0 0
    %308 = vmatpush1.bf16.msra.mxu0 %v264
    %309 = vmatprep.subr.bf16.mxu0 0
    %310 = vmatpush1.bf16.msra.mxu0 %v265
    %311 = vmatprep.subr.bf16.mxu0 0
    %312 = vmatpush1.bf16.msra.mxu0 %v266
    %313 = vmatprep.subr.bf16.mxu0 0
    %314 = vmatpush1.bf16.msra.mxu0 %v267
    %315 = vmatprep.subr.bf16.mxu0 0
    %316 = vmatpush1.bf16.msra.mxu0 %v268
    %317 = vmatprep.mubr.bf16.mxu0 %v149
    %318 = vmatmul.mubr.bf16.gmra.mrb[0].mxu0 %v148
    %v319 = vpop.f32.mrb[0].mxu0
    %v320 = vadd.f32 %v187, %v319
    %v321 = vpop.f32.mrb[0].mxu0
    %v322 = vpop.f32.mrb[0].mxu0
    %v323 = vpop.f32.mrb[0].mxu0
    %324 = vdwg.mxu0
    %v325 = vpack.c.bf16 %v320, %v320
    %326 = vst [vmem:[#allocation8] sm:$0xf] %v325
    %327 = vrot.lane.b32.xlu0 %v320, 64
    %v328 = vpop.permute.xlu0 %327
    %v329 = vsub.f32 %v320, %v328
    %v330 = vmul.f32 %v329, %v329
    %vm331 = vcmask 523264
    %v332 = vsel %vm331, %v330, 0.0
    %333 = vadd.xlane.f32.xlu0 %v332
    %v334 = vpop.xlane.xlu0 %333
    %v335 = vmul.f32 %v334, 0.015625
    %vm336 = vcmask 7168
    %337 = vst.msk [vmem:[%s6] sm:$0xff] %vm336, %v335
    // Predicated region
    $region34: #{tpu_custom_call.1} parent=1 // pred_check
      _
    $region35: #{tpu_custom_call.1} parent=1 // pred_check_branch
      %339 = sbr.rel (0) target = $region37
    $region36: #{tpu_custom_call.1} parent=1 // pred_region
      %s341 = ssub.s32 64, 64
      %342 = vsyncadd [#allocation4], %s341
      %s344 = sshll.u32 [#allocation8], 4
      %s345 = int_to_ptr.vmem [resolvable:$true] %s344
      %347 = dma.vmem_to_hbm [thread:$0]  %s345, 64, %s5, [#allocation4]
    $region37: #{tpu_custom_call.1} parent=1 // pred_fallthru
      _
    // Predicated region
    $region38: #{tpu_custom_call.1} parent=1 // pred_check
      _
    $region39: #{tpu_custom_call.1} parent=1 // pred_check_branch
      %349 = sbr.rel (0) target = $region41
    $region40: #{tpu_custom_call.1} parent=1 // pred_region
      _
    $region41: #{tpu_custom_call.1} parent=1 // pred_fallthru
      _
    // Predicated region
    $region42: #{tpu_custom_call.1} parent=1 // pred_check
      _
    $region43: #{tpu_custom_call.1} parent=1 // pred_check_branch
      %351 = sbr.rel (0) target = $region45
    $region44: #{tpu_custom_call.1} parent=1 // pred_region
      %352 = dma.done [#allocation4], 64
    $region45: #{tpu_custom_call.1} parent=1 // pred_fallthru
      _
    // Predicated region
    $region46: #{tpu_custom_call.1} parent=1 // pred_check
      _
    $region47: #{tpu_custom_call.1} parent=1 // pred_check_branch
      %354 = sbr.rel (0) target = $region49
    $region48: #{tpu_custom_call.1} parent=1 // pred_region
      _
    $region49: #{tpu_custom_call.1} parent=1 // pred_fallthru
      _
    %355 = vsyncpa [#allocation3], 1
    %356 = vsyncpa [#allocation6], 1
    %357 = vsyncpa [#allocation4], 1

</llo_original>
